<compile_context>
chip_gen: v5e
topology: v5e:2x2
jax: 0.10.0
libtpu: 0.0.40
codegen_flags: <defaults>
</compile_context>

<pallas_src>
import jax
import jax.numpy as jnp
from jax import lax
from jax.experimental import pallas as pl
from jax.experimental.pallas import tpu as pltpu


def _leaky_relu(x, slope=0.001):
    return jnp.where(x >= 0, x, slope * x)


# Contract last dim of lhs with last dim of rhs:  A[m,k] . B[n,k] -> [m,n]
_CONTRACT_LAST_LAST = (((1,), (1,)), ((), ()))


def dynamics_kernel(s_ref, a_ref,
                    w1s_ref, w1a_ref, b1_ref,
                    w2_ref, b2_ref,
                    w3_ref, b3_ref,
                    w4_ref, b4_ref,
                    w5_ref, b5_ref,
                    w6_ref, b6_ref,
                    o_ref):
    """One batch tile: 6 matmuls + 5 leaky_relu(0.001), feature-major chain."""
    # Layer 1 fuses the concat: h = W1_s @ s^T + W1_a @ a^T + b1  -> [H, TB]
    h = (lax.dot_general(w1s_ref[...], s_ref[...], _CONTRACT_LAST_LAST,
                         preferred_element_type=jnp.float32)
         + lax.dot_general(w1a_ref[...], a_ref[...], _CONTRACT_LAST_LAST,
                           preferred_element_type=jnp.float32)
         + b1_ref[...])
    h = _leaky_relu(h)

    # Layers 2..5: W[H,H] @ h[H,TB] + b[H,1], lane-dense activations.
    for w_ref, b_ref in ((w2_ref, b2_ref), (w3_ref, b3_ref),
                         (w4_ref, b4_ref), (w5_ref, b5_ref)):
        h = _leaky_relu(
            jnp.dot(w_ref[...], h, preferred_element_type=jnp.float32)
            + b_ref[...])

    # Layer 6: W6[S,H] @ h[H,TB] + b6[S,1] -> [S, TB]; transpose back to the
    # batch-major (TB, S) output layout expected by the module.
    y = jnp.dot(w6_ref[...], h, preferred_element_type=jnp.float32) + b6_ref[...]
    o_ref[...] = y.T.astype(o_ref.dtype)


def init_params(key, state_dim, hidden_dim, action_dim):
    """Mirror PyTorch _init_parameters: W ~ N(0, 0.01) (out, in), b = 0 (out,)."""
    dims_in = [state_dim + action_dim] + [hidden_dim] * 5
    dims_out = [hidden_dim] * 5 + [state_dim]
    params = []
    for din, dout in zip(dims_in, dims_out):
        key, sub = jax.random.split(key)
        w = 0.01 * jax.random.normal(sub, (dout, din), dtype=jnp.float32)
        b = jnp.zeros((dout,), dtype=jnp.float32)
        params.append((w, b))
    return params


def dynamics_continuous_forward(s, a, params, *, tb=512):
    """s: [B, state_dim], a: [B, action_dim] -> [B, state_dim]."""
    s = s.astype(jnp.float32)
    a = a.astype(jnp.float32)
    B, state_dim = s.shape
    action_dim = a.shape[1]
    hidden_dim = params[0][0].shape[0]

    # Batch tile: full batch when small, else `tb` (multiple of 8; partial last
    # blocks are handled per-row independently so masking is safe).
    TB = B if B <= tb else tb
    nb = pl.cdiv(B, TB)

    (w1, b1), (w2, b2), (w3, b3), (w4, b4), (w5, b5), (w6, b6) = params
    # Split W1 so the concat can be fused inside the kernel.
    w1s = w1[:, :state_dim]
    w1a = w1[:, state_dim:]
    col = lambda b: b.reshape(-1, 1)  # feature-major bias [out, 1]
    flat_params = [w1s, w1a, col(b1),
                   w2, col(b2), w3, col(b3), w4, col(b4), w5, col(b5),
                   w6, col(b6)]

    def batch_spec(feat):
        return pl.BlockSpec((TB, feat), lambda i: (i, 0))

    def const_spec(arr):
        # Same block every grid step -> stays resident in VMEM (no re-DMA).
        return pl.BlockSpec(arr.shape, lambda i: (0, 0))

    in_specs = ([batch_spec(state_dim), batch_spec(action_dim)]
                + [const_spec(p) for p in flat_params])
    out_spec = batch_spec(state_dim)

    flops = 2 * B * ((state_dim + action_dim) * hidden_dim
                     + 4 * hidden_dim * hidden_dim
                     + hidden_dim * state_dim)
    param_bytes = sum(int(p.size) * 4 for p in flat_params)
    bytes_accessed = 4 * B * (2 * state_dim + action_dim) + param_bytes

    out = pl.pallas_call(
        dynamics_kernel,
        out_shape=jax.ShapeDtypeStruct((B, state_dim), jnp.float32),
        grid=(nb,),
        in_specs=in_specs,
        out_specs=out_spec,
        compiler_params=pltpu.CompilerParams(
            dimension_semantics=("parallel",)),
        cost_estimate=pl.CostEstimate(flops=flops, transcendentals=0,
                                      bytes_accessed=bytes_accessed),
    )(s, a, *flat_params)
    return out


def _reference_forward(s, a, params):
    """Pure-JAX reference with PyTorch-native (out, in) weights."""
    x = jnp.concatenate([s, a], axis=1).astype(jnp.float32)
    for i, (w, b) in enumerate(params):
        x = x @ w.T + b
        if i < len(params) - 1:
            x = jnp.where(x >= 0, x, 0.001 * x)
    return x


if __name__ == "__main__":
    key = jax.random.PRNGKey(0)

    batch = 2
    state_dim = 8
    hidden_dim = 32
    action_dim = 4

    k_params, k_s, k_a = jax.random.split(key, 3)
    params = init_params(k_params, state_dim, hidden_dim, action_dim)

    s = jax.random.normal(k_s, (batch, state_dim), dtype=jnp.float32)
    a = jax.random.normal(k_a, (batch, action_dim), dtype=jnp.float32)

    out = jax.block_until_ready(dynamics_continuous_forward(s, a, params))
    ref = _reference_forward(s, a, params)
    assert out.shape == (batch, state_dim)
    assert jnp.allclose(out, ref, atol=1e-5, rtol=1e-5)

    # Also exercise the multi-step batch grid (weights resident across steps).
    B2 = 384
    s2 = jax.random.normal(jax.random.PRNGKey(1), (B2, state_dim), dtype=jnp.float32)
    a2 = jax.random.normal(jax.random.PRNGKey(2), (B2, action_dim), dtype=jnp.float32)
    out2 = jax.block_until_ready(
        dynamics_continuous_forward(s2, a2, params, tb=128))
    ref2 = _reference_forward(s2, a2, params)
    assert jnp.allclose(out2, ref2, atol=1e-5, rtol=1e-4)

    print("KERNEL_OK")
</pallas_src>

<mosaic_0001>
module attributes {stable_mosaic.version = 11 : i64} {
  func.func @dynamics_kernel(%arg0: i32, %arg1: memref<2x8xf32, #tpu.memory_space<vmem>>, %arg2: memref<2x4xf32, #tpu.memory_space<vmem>>, %arg3: memref<32x8xf32, #tpu.memory_space<vmem>>, %arg4: memref<32x4xf32, #tpu.memory_space<vmem>>, %arg5: memref<32x1xf32, #tpu.memory_space<vmem>>, %arg6: memref<32x32xf32, #tpu.memory_space<vmem>>, %arg7: memref<32x1xf32, #tpu.memory_space<vmem>>, %arg8: memref<32x32xf32, #tpu.memory_space<vmem>>, %arg9: memref<32x1xf32, #tpu.memory_space<vmem>>, %arg10: memref<32x32xf32, #tpu.memory_space<vmem>>, %arg11: memref<32x1xf32, #tpu.memory_space<vmem>>, %arg12: memref<32x32xf32, #tpu.memory_space<vmem>>, %arg13: memref<32x1xf32, #tpu.memory_space<vmem>>, %arg14: memref<8x32xf32, #tpu.memory_space<vmem>>, %arg15: memref<8x1xf32, #tpu.memory_space<vmem>>, %arg16: memref<2x8xf32, #tpu.memory_space<vmem>>) attributes {dimension_semantics = [#tpu.dimension_semantics<parallel>], iteration_bounds = array<i64: 1>, scalar_prefetch = 0 : i64, scratch_operands = 0 : i64, tpu.core_type = #tpu.core_type<tc>, window_params = [{transform_indices = @transform_0, window_bounds = array<i64: 2, 8>}, {transform_indices = @transform_1, window_bounds = array<i64: 2, 4>}, {pipeline_mode = #tpu.pipeline_mode<synchronous>, transform_indices = @transform_2, window_bounds = array<i64: 32, 8>}, {pipeline_mode = #tpu.pipeline_mode<synchronous>, transform_indices = @transform_3, window_bounds = array<i64: 32, 4>}, {pipeline_mode = #tpu.pipeline_mode<synchronous>, transform_indices = @transform_4, window_bounds = array<i64: 32, 1>}, {pipeline_mode = #tpu.pipeline_mode<synchronous>, transform_indices = @transform_5, window_bounds = array<i64: 32, 32>}, {pipeline_mode = #tpu.pipeline_mode<synchronous>, transform_indices = @transform_6, window_bounds = array<i64: 32, 1>}, {pipeline_mode = #tpu.pipeline_mode<synchronous>, transform_indices = @transform_7, window_bounds = array<i64: 32, 32>}, {pipeline_mode = #tpu.pipeline_mode<synchronous>, transform_indices = @transform_8, window_bounds = array<i64: 32, 1>}, {pipeline_mode = #tpu.pipeline_mode<synchronous>, transform_indices = @transform_9, window_bounds = array<i64: 32, 32>}, {pipeline_mode = #tpu.pipeline_mode<synchronous>, transform_indices = @transform_10, window_bounds = array<i64: 32, 1>}, {pipeline_mode = #tpu.pipeline_mode<synchronous>, transform_indices = @transform_11, window_bounds = array<i64: 32, 32>}, {pipeline_mode = #tpu.pipeline_mode<synchronous>, transform_indices = @transform_12, window_bounds = array<i64: 32, 1>}, {pipeline_mode = #tpu.pipeline_mode<synchronous>, transform_indices = @transform_13, window_bounds = array<i64: 8, 32>}, {pipeline_mode = #tpu.pipeline_mode<synchronous>, transform_indices = @transform_14, window_bounds = array<i64: 8, 1>}, {transform_indices = @transform_15, window_bounds = array<i64: 2, 8>}]} {
    %c0 = arith.constant 0 : index
    %c0_0 = arith.constant 0 : index
    %0 = vector.load %arg3[%c0, %c0_0] : memref<32x8xf32, #tpu.memory_space<vmem>>, vector<32x8xf32>
    %c0_1 = arith.constant 0 : index
    %c0_2 = arith.constant 0 : index
    %1 = vector.load %arg1[%c0_1, %c0_2] : memref<2x8xf32, #tpu.memory_space<vmem>>, vector<2x8xf32>
    %cst = arith.constant dense<0.000000e+00> : vector<32x2xf32>
    %2 = tpu.matmul %0, %1, %cst {dimension_numbers = #tpu.dot_dimension_numbers<[1], [1], [0], [0], [0, 0, 1, 0], [], []>} : vector<32x8xf32>, vector<2x8xf32>, vector<32x2xf32> -> vector<32x2xf32>
    %c0_3 = arith.constant 0 : index
    %c0_4 = arith.constant 0 : index
    %3 = vector.load %arg4[%c0_3, %c0_4] : memref<32x4xf32, #tpu.memory_space<vmem>>, vector<32x4xf32>
    %c0_5 = arith.constant 0 : index
    %c0_6 = arith.constant 0 : index
    %4 = vector.load %arg2[%c0_5, %c0_6] : memref<2x4xf32, #tpu.memory_space<vmem>>, vector<2x4xf32>
    %cst_7 = arith.constant dense<0.000000e+00> : vector<32x2xf32>
    %5 = tpu.matmul %3, %4, %cst_7 {dimension_numbers = #tpu.dot_dimension_numbers<[1], [1], [0], [0], [0, 0, 1, 0], [], []>} : vector<32x4xf32>, vector<2x4xf32>, vector<32x2xf32> -> vector<32x2xf32>
    %6 = arith.addf %2, %5 : vector<32x2xf32>
    %c0_8 = arith.constant 0 : index
    %c0_9 = arith.constant 0 : index
    %7 = vector.load %arg5[%c0_8, %c0_9] : memref<32x1xf32, #tpu.memory_space<vmem>>, vector<32x1xf32>
    %8 = vector.broadcast %7 : vector<32x1xf32> to vector<32x2xf32>
    %9 = arith.addf %6, %8 : vector<32x2xf32>
    %cst_10 = arith.constant 0.000000e+00 : f32
    %10 = vector.broadcast %cst_10 : f32 to vector<32x2xf32>
    %11 = arith.cmpf oge, %9, %10 : vector<32x2xf32>
    %cst_11 = arith.constant 1.000000e-03 : f32
    %12 = vector.broadcast %cst_11 : f32 to vector<32x2xf32>
    %13 = arith.mulf %12, %9 : vector<32x2xf32>
    %14 = arith.select %11, %9, %13 : vector<32x2xi1>, vector<32x2xf32>
    %c0_12 = arith.constant 0 : index
    %c0_13 = arith.constant 0 : index
    %15 = vector.load %arg6[%c0_12, %c0_13] : memref<32x32xf32, #tpu.memory_space<vmem>>, vector<32x32xf32>
    %cst_14 = arith.constant dense<0.000000e+00> : vector<32x2xf32>
    %16 = tpu.matmul %15, %14, %cst_14 {dimension_numbers = #tpu.dot_dimension_numbers<[1], [0], [0], [1], [0, 0, 1, 1], [], []>} : vector<32x32xf32>, vector<32x2xf32>, vector<32x2xf32> -> vector<32x2xf32>
    %c0_15 = arith.constant 0 : index
    %c0_16 = arith.constant 0 : index
    %17 = vector.load %arg7[%c0_15, %c0_16] : memref<32x1xf32, #tpu.memory_space<vmem>>, vector<32x1xf32>
    %18 = vector.broadcast %17 : vector<32x1xf32> to vector<32x2xf32>
    %19 = arith.addf %16, %18 : vector<32x2xf32>
    %cst_17 = arith.constant 0.000000e+00 : f32
    %20 = vector.broadcast %cst_17 : f32 to vector<32x2xf32>
    %21 = arith.cmpf oge, %19, %20 : vector<32x2xf32>
    %cst_18 = arith.constant 1.000000e-03 : f32
    %22 = vector.broadcast %cst_18 : f32 to vector<32x2xf32>
    %23 = arith.mulf %22, %19 : vector<32x2xf32>
    %24 = arith.select %21, %19, %23 : vector<32x2xi1>, vector<32x2xf32>
    %c0_19 = arith.constant 0 : index
    %c0_20 = arith.constant 0 : index
    %25 = vector.load %arg8[%c0_19, %c0_20] : memref<32x32xf32, #tpu.memory_space<vmem>>, vector<32x32xf32>
    %cst_21 = arith.constant dense<0.000000e+00> : vector<32x2xf32>
    %26 = tpu.matmul %25, %24, %cst_21 {dimension_numbers = #tpu.dot_dimension_numbers<[1], [0], [0], [1], [0, 0, 1, 1], [], []>} : vector<32x32xf32>, vector<32x2xf32>, vector<32x2xf32> -> vector<32x2xf32>
    %c0_22 = arith.constant 0 : index
    %c0_23 = arith.constant 0 : index
    %27 = vector.load %arg9[%c0_22, %c0_23] : memref<32x1xf32, #tpu.memory_space<vmem>>, vector<32x1xf32>
    %28 = vector.broadcast %27 : vector<32x1xf32> to vector<32x2xf32>
    %29 = arith.addf %26, %28 : vector<32x2xf32>
    %cst_24 = arith.constant 0.000000e+00 : f32
    %30 = vector.broadcast %cst_24 : f32 to vector<32x2xf32>
    %31 = arith.cmpf oge, %29, %30 : vector<32x2xf32>
    %cst_25 = arith.constant 1.000000e-03 : f32
    %32 = vector.broadcast %cst_25 : f32 to vector<32x2xf32>
    %33 = arith.mulf %32, %29 : vector<32x2xf32>
    %34 = arith.select %31, %29, %33 : vector<32x2xi1>, vector<32x2xf32>
    %c0_26 = arith.constant 0 : index
    %c0_27 = arith.constant 0 : index
    %35 = vector.load %arg10[%c0_26, %c0_27] : memref<32x32xf32, #tpu.memory_space<vmem>>, vector<32x32xf32>
    %cst_28 = arith.constant dense<0.000000e+00> : vector<32x2xf32>
    %36 = tpu.matmul %35, %34, %cst_28 {dimension_numbers = #tpu.dot_dimension_numbers<[1], [0], [0], [1], [0, 0, 1, 1], [], []>} : vector<32x32xf32>, vector<32x2xf32>, vector<32x2xf32> -> vector<32x2xf32>
    %c0_29 = arith.constant 0 : index
    %c0_30 = arith.constant 0 : index
    %37 = vector.load %arg11[%c0_29, %c0_30] : memref<32x1xf32, #tpu.memory_space<vmem>>, vector<32x1xf32>
    %38 = vector.broadcast %37 : vector<32x1xf32> to vector<32x2xf32>
    %39 = arith.addf %36, %38 : vector<32x2xf32>
    %cst_31 = arith.constant 0.000000e+00 : f32
    %40 = vector.broadcast %cst_31 : f32 to vector<32x2xf32>
    %41 = arith.cmpf oge, %39, %40 : vector<32x2xf32>
    %cst_32 = arith.constant 1.000000e-03 : f32
    %42 = vector.broadcast %cst_32 : f32 to vector<32x2xf32>
    %43 = arith.mulf %42, %39 : vector<32x2xf32>
    %44 = arith.select %41, %39, %43 : vector<32x2xi1>, vector<32x2xf32>
    %c0_33 = arith.constant 0 : index
    %c0_34 = arith.constant 0 : index
    %45 = vector.load %arg12[%c0_33, %c0_34] : memref<32x32xf32, #tpu.memory_space<vmem>>, vector<32x32xf32>
    %cst_35 = arith.constant dense<0.000000e+00> : vector<32x2xf32>
    %46 = tpu.matmul %45, %44, %cst_35 {dimension_numbers = #tpu.dot_dimension_numbers<[1], [0], [0], [1], [0, 0, 1, 1], [], []>} : vector<32x32xf32>, vector<32x2xf32>, vector<32x2xf32> -> vector<32x2xf32>
    %c0_36 = arith.constant 0 : index
    %c0_37 = arith.constant 0 : index
    %47 = vector.load %arg13[%c0_36, %c0_37] : memref<32x1xf32, #tpu.memory_space<vmem>>, vector<32x1xf32>
    %48 = vector.broadcast %47 : vector<32x1xf32> to vector<32x2xf32>
    %49 = arith.addf %46, %48 : vector<32x2xf32>
    %cst_38 = arith.constant 0.000000e+00 : f32
    %50 = vector.broadcast %cst_38 : f32 to vector<32x2xf32>
    %51 = arith.cmpf oge, %49, %50 : vector<32x2xf32>
    %cst_39 = arith.constant 1.000000e-03 : f32
    %52 = vector.broadcast %cst_39 : f32 to vector<32x2xf32>
    %53 = arith.mulf %52, %49 : vector<32x2xf32>
    %54 = arith.select %51, %49, %53 : vector<32x2xi1>, vector<32x2xf32>
    %c0_40 = arith.constant 0 : index
    %c0_41 = arith.constant 0 : index
    %55 = vector.load %arg14[%c0_40, %c0_41] : memref<8x32xf32, #tpu.memory_space<vmem>>, vector<8x32xf32>
    %cst_42 = arith.constant dense<0.000000e+00> : vector<8x2xf32>
    %56 = tpu.matmul %55, %54, %cst_42 {dimension_numbers = #tpu.dot_dimension_numbers<[1], [0], [0], [1], [0, 0, 1, 1], [], []>} : vector<8x32xf32>, vector<32x2xf32>, vector<8x2xf32> -> vector<8x2xf32>
    %c0_43 = arith.constant 0 : index
    %c0_44 = arith.constant 0 : index
    %57 = vector.load %arg15[%c0_43, %c0_44] : memref<8x1xf32, #tpu.memory_space<vmem>>, vector<8x1xf32>
    %58 = vector.broadcast %57 : vector<8x1xf32> to vector<8x2xf32>
    %59 = arith.addf %56, %58 : vector<8x2xf32>
    %60 = tpu.transpose %59, [1, 0] : vector<8x2xf32> -> vector<2x8xf32>
    %c0_45 = arith.constant 0 : index
    %c0_46 = arith.constant 0 : index
    %61 = vector.load %arg16[%c0_45, %c0_46] : memref<2x8xf32, #tpu.memory_space<vmem>>, vector<2x8xf32>
    tpu.vector_store %arg16[%c0_45, %c0_46], %60 {strides = array<i32>} : memref<2x8xf32, #tpu.memory_space<vmem>>, vector<2x8xf32>,
    return
  }
  func.func @transform_0(%arg0: i32) -> (i32, i32) {
    %c0_i32 = arith.constant 0 : i32
    %c0_i32_0 = arith.constant 0 : i32
    return %arg0, %c0_i32 : i32, i32
  }
  func.func @transform_1(%arg0: i32) -> (i32, i32) {
    %c0_i32 = arith.constant 0 : i32
    %c0_i32_0 = arith.constant 0 : i32
    return %arg0, %c0_i32 : i32, i32
  }
  func.func @transform_2(%arg0: i32) -> (i32, i32) {
    %c0_i32 = arith.constant 0 : i32
    %c0_i32_0 = arith.constant 0 : i32
    %c0_i32_1 = arith.constant 0 : i32
    return %c0_i32, %c0_i32_0 : i32, i32
  }
  func.func @transform_3(%arg0: i32) -> (i32, i32) {
    %c0_i32 = arith.constant 0 : i32
    %c0_i32_0 = arith.constant 0 : i32
    %c0_i32_1 = arith.constant 0 : i32
    return %c0_i32, %c0_i32_0 : i32, i32
  }
  func.func @transform_4(%arg0: i32) -> (i32, i32) {
    %c0_i32 = arith.constant 0 : i32
    %c0_i32_0 = arith.constant 0 : i32
    %c0_i32_1 = arith.constant 0 : i32
    return %c0_i32, %c0_i32_0 : i32, i32
  }
  func.func @transform_5(%arg0: i32) -> (i32, i32) {
    %c0_i32 = arith.constant 0 : i32
    %c0_i32_0 = arith.constant 0 : i32
    %c0_i32_1 = arith.constant 0 : i32
    return %c0_i32, %c0_i32_0 : i32, i32
  }
  func.func @transform_6(%arg0: i32) -> (i32, i32) {
    %c0_i32 = arith.constant 0 : i32
    %c0_i32_0 = arith.constant 0 : i32
    %c0_i32_1 = arith.constant 0 : i32
    return %c0_i32, %c0_i32_0 : i32, i32
  }
  func.func @transform_7(%arg0: i32) -> (i32, i32) {
    %c0_i32 = arith.constant 0 : i32
    %c0_i32_0 = arith.constant 0 : i32
    %c0_i32_1 = arith.constant 0 : i32
    return %c0_i32, %c0_i32_0 : i32, i32
  }
  func.func @transform_8(%arg0: i32) -> (i32, i32) {
    %c0_i32 = arith.constant 0 : i32
    %c0_i32_0 = arith.constant 0 : i32
    %c0_i32_1 = arith.constant 0 : i32
    return %c0_i32, %c0_i32_0 : i32, i32
  }
  func.func @transform_9(%arg0: i32) -> (i32, i32) {
    %c0_i32 = arith.constant 0 : i32
    %c0_i32_0 = arith.constant 0 : i32
    %c0_i32_1 = arith.constant 0 : i32
    return %c0_i32, %c0_i32_0 : i32, i32
  }
  func.func @transform_10(%arg0: i32) -> (i32, i32) {
    %c0_i32 = arith.constant 0 : i32
    %c0_i32_0 = arith.constant 0 : i32
    %c0_i32_1 = arith.constant 0 : i32
    return %c0_i32, %c0_i32_0 : i32, i32
  }
  func.func @transform_11(%arg0: i32) -> (i32, i32) {
    %c0_i32 = arith.constant 0 : i32
    %c0_i32_0 = arith.constant 0 : i32
    %c0_i32_1 = arith.constant 0 : i32
    return %c0_i32, %c0_i32_0 : i32, i32
  }
  func.func @transform_12(%arg0: i32) -> (i32, i32) {
    %c0_i32 = arith.constant 0 : i32
    %c0_i32_0 = arith.constant 0 : i32
    %c0_i32_1 = arith.constant 0 : i32
    return %c0_i32, %c0_i32_0 : i32, i32
  }
  func.func @transform_13(%arg0: i32) -> (i32, i32) {
    %c0_i32 = arith.constant 0 : i32
    %c0_i32_0 = arith.constant 0 : i32
    %c0_i32_1 = arith.constant 0 : i32
    return %c0_i32, %c0_i32_0 : i32, i32
  }
  func.func @transform_14(%arg0: i32) -> (i32, i32) {
    %c0_i32 = arith.constant 0 : i32
    %c0_i32_0 = arith.constant 0 : i32
    %c0_i32_1 = arith.constant 0 : i32
    return %c0_i32, %c0_i32_0 : i32, i32
  }
  func.func @transform_15(%arg0: i32) -> (i32, i32) {
    %c0_i32 = arith.constant 0 : i32
    %c0_i32_0 = arith.constant 0 : i32
    return %arg0, %c0_i32 : i32, i32
  }
}

</mosaic_0001>

<llo_original>
// kernel: tpu_custom_call.1
$region0: #{tpu_custom_call.1}
  #allocation0 [shape = 'u32[]', space=smem, size = 0x4, offset = 0x4, fixed_abs, tag = 'smem constant byte address 0x4 - core index']
  #allocation1 [shape = 'u32[72,128]{1,0:T(1,128)}', space=vmem, size = 0x9000, scoped, tag = 'internal scratch']
  %s0 = inlined_call_operand.vmem [shape: f32[2,8], index: 0, kind: input, shape index: {}]
  %s1 = inlined_call_operand.vmem [shape: f32[2,4], index: 1, kind: input, shape index: {}]
  %s2 = inlined_call_operand.vmem [shape: f32[32,8], index: 2, kind: input, shape index: {}]
  %s3 = inlined_call_operand.vmem [shape: f32[32,4], index: 3, kind: input, shape index: {}]
  %s4 = inlined_call_operand.vmem [shape: f32[32,1], index: 4, kind: input, shape index: {}]
  %s5 = inlined_call_operand.vmem [shape: f32[32,32], index: 5, kind: input, shape index: {}]
  %s6 = inlined_call_operand.vmem [shape: f32[32,1], index: 6, kind: input, shape index: {}]
  %s7 = inlined_call_operand.vmem [shape: f32[32,32], index: 7, kind: input, shape index: {}]
  %s8 = inlined_call_operand.vmem [shape: f32[32,1], index: 8, kind: input, shape index: {}]
  %s9 = inlined_call_operand.vmem [shape: f32[32,32], index: 9, kind: input, shape index: {}]
  %s10 = inlined_call_operand.vmem [shape: f32[32,1], index: 10, kind: input, shape index: {}]
  %s11 = inlined_call_operand.vmem [shape: f32[32,32], index: 11, kind: input, shape index: {}]
  %s12 = inlined_call_operand.vmem [shape: f32[32,1], index: 12, kind: input, shape index: {}]
  %s13 = inlined_call_operand.vmem [shape: f32[8,32], index: 13, kind: input, shape index: {}]
  %s14 = inlined_call_operand.vmem [shape: f32[8,1], index: 14, kind: input, shape index: {}]
  %s15 = inlined_call_operand.hbm [shape: f32[2,8], index: 15, kind: output, shape index: {}]
  %s16 = sld [smem:[#allocation0]]
  $region70: #{tpu_custom_call.1} parent=0
    _
  %s18 = ssub.s32 1, %s16
  %s19 = scalar_select 0, %s18, %s16
  $region1: #{tpu_custom_call.1} parent=0
    #allocation2 [shape = 'u8[1024]{0}', space=vmem, size = 0x400, scoped, tag = 'output window, operand 0, single buffered']
    #allocation3 [shape = 's32[1]{0}', space=sflag, size = 0x4, scoped, tag = 'scoped memory for tpu_custom_call.1']
    %20 = vsyncpa [#allocation3], 0
    // Predicated region
    $region2: #{tpu_custom_call.1} parent=1 // pred_check
      _
    $region3: #{tpu_custom_call.1} parent=1 // pred_check_branch
      %22 = sbr.rel (0) target = $region5
    $region4: #{tpu_custom_call.1} parent=1 // pred_region
      _
    $region5: #{tpu_custom_call.1} parent=1 // pred_fallthru
      _
    // Predicated region
    $region6: #{tpu_custom_call.1} parent=1 // pred_check
      _
    $region7: #{tpu_custom_call.1} parent=1 // pred_check_branch
      %24 = sbr.rel (0) target = $region9
    $region8: #{tpu_custom_call.1} parent=1 // pred_region
      _
    $region9: #{tpu_custom_call.1} parent=1 // pred_fallthru
      _
    // Predicated region
    $region10: #{tpu_custom_call.1} parent=1 // pred_check
      _
    $region11: #{tpu_custom_call.1} parent=1 // pred_check_branch
      %26 = sbr.rel (0) target = $region13
    $region12: #{tpu_custom_call.1} parent=1 // pred_region
      _
    $region13: #{tpu_custom_call.1} parent=1 // pred_fallthru
      _
    // Predicated region
    $region14: #{tpu_custom_call.1} parent=1 // pred_check
      _
    $region15: #{tpu_custom_call.1} parent=1 // pred_check_branch
      %28 = sbr.rel (0) target = $region17
    $region16: #{tpu_custom_call.1} parent=1 // pred_region
      _
    $region17: #{tpu_custom_call.1} parent=1 // pred_fallthru
      _
    // Predicated region
    $region18: #{tpu_custom_call.1} parent=1 // pred_check
      _
    $region19: #{tpu_custom_call.1} parent=1 // pred_check_branch
      %30 = sbr.rel (0) target = $region21
    $region20: #{tpu_custom_call.1} parent=1 // pred_region
      _
    $region21: #{tpu_custom_call.1} parent=1 // pred_fallthru
      _
    // Predicated region
    $region22: #{tpu_custom_call.1} parent=1 // pred_check
      _
    $region23: #{tpu_custom_call.1} parent=1 // pred_check_branch
      %32 = sbr.rel (0) target = $region25
    $region24: #{tpu_custom_call.1} parent=1 // pred_region
      _
    $region25: #{tpu_custom_call.1} parent=1 // pred_fallthru
      _
    // Predicated region
    $region26: #{tpu_custom_call.1} parent=1 // pred_check
      _
    $region27: #{tpu_custom_call.1} parent=1 // pred_check_branch
      %34 = sbr.rel (0) target = $region29
    $region28: #{tpu_custom_call.1} parent=1 // pred_region
      _
    $region29: #{tpu_custom_call.1} parent=1 // pred_fallthru
      _
    // Predicated region
    $region30: #{tpu_custom_call.1} parent=1 // pred_check
      _
    $region31: #{tpu_custom_call.1} parent=1 // pred_check_branch
      %36 = sbr.rel (0) target = $region33
    $region32: #{tpu_custom_call.1} parent=1 // pred_region
      _
    $region33: #{tpu_custom_call.1} parent=1 // pred_fallthru
      _
    // Predicated region
    $region34: #{tpu_custom_call.1} parent=1 // pred_check
      _
    $region35: #{tpu_custom_call.1} parent=1 // pred_check_branch
      %38 = sbr.rel (0) target = $region37
    $region36: #{tpu_custom_call.1} parent=1 // pred_region
      _
    $region37: #{tpu_custom_call.1} parent=1 // pred_fallthru
      _
    // Predicated region
    $region38: #{tpu_custom_call.1} parent=1 // pred_check
      _
    $region39: #{tpu_custom_call.1} parent=1 // pred_check_branch
      %40 = sbr.rel (0) target = $region41
    $region40: #{tpu_custom_call.1} parent=1 // pred_region
      _
    $region41: #{tpu_custom_call.1} parent=1 // pred_fallthru
      _
    // Predicated region
    $region42: #{tpu_custom_call.1} parent=1 // pred_check
      _
    $region43: #{tpu_custom_call.1} parent=1 // pred_check_branch
      %42 = sbr.rel (0) target = $region45
    $region44: #{tpu_custom_call.1} parent=1 // pred_region
      _
    $region45: #{tpu_custom_call.1} parent=1 // pred_fallthru
      _
    // Predicated region
    $region46: #{tpu_custom_call.1} parent=1 // pred_check
      _
    $region47: #{tpu_custom_call.1} parent=1 // pred_check_branch
      %44 = sbr.rel (0) target = $region49
    $region48: #{tpu_custom_call.1} parent=1 // pred_region
      _
    $region49: #{tpu_custom_call.1} parent=1 // pred_fallthru
      _
    // Predicated region
    $region50: #{tpu_custom_call.1} parent=1 // pred_check
      _
    $region51: #{tpu_custom_call.1} parent=1 // pred_check_branch
      %46 = sbr.rel (0) target = $region53
    $region52: #{tpu_custom_call.1} parent=1 // pred_region
      _
    $region53: #{tpu_custom_call.1} parent=1 // pred_fallthru
      _
    // Predicated region
    $region54: #{tpu_custom_call.1} parent=1 // pred_check
      _
    $region55: #{tpu_custom_call.1} parent=1 // pred_check_branch
      %48 = sbr.rel (0) target = $region57
    $region56: #{tpu_custom_call.1} parent=1 // pred_region
      _
    $region57: #{tpu_custom_call.1} parent=1 // pred_fallthru
      _
    // Predicated region
    $region58: #{tpu_custom_call.1} parent=1 // pred_check
      _
    $region59: #{tpu_custom_call.1} parent=1 // pred_check_branch
      %50 = sbr.rel (0) target = $region61
    $region60: #{tpu_custom_call.1} parent=1 // pred_region
      _
    $region61: #{tpu_custom_call.1} parent=1 // pred_fallthru
      _
    %v51 = vld [vmem:[%s2] sm:$0xff]
    %v52 = vld [vmem:[%s2 + $0x8] sm:$0xff]
    %v53 = vld [vmem:[%s2 + $0x10] sm:$0xff]
    %v54 = vld [vmem:[%s2 + $0x18] sm:$0xff]
    %v55 = vld [vmem:[%s0] sm:$0x3]
    %v56 = vld [vmem:[%s3] sm:$0xff]
    %v57 = vld [vmem:[%s3 + $0x8] sm:$0xff]
    %v58 = vld [vmem:[%s3 + $0x10] sm:$0xff]
    %v59 = vld [vmem:[%s3 + $0x18] sm:$0xff]
    %v60 = vld [vmem:[%s1] sm:$0x3]
    %vm61 = vcmask 31744
    %v63 = vsel %vm61, %v56, 0
    %v66 = vsel %vm61, %v57, 0
    %v69 = vsel %vm61, %v58, 0
    %v72 = vsel %vm61, %v59, 0
    %v75 = vsel %vm61, %v60, 0
    %77 = vmatpush.xpose.msra.mxu0 0.0
    %78 = vmatpush.xpose.msra.mxu0 0.0
    %79 = vmatpush.xpose.msra.mxu0 0.0
    %80 = vmatpush.xpose.msra.mxu0 0.0
    %81 = vmatpush.xpose.msra.mxu0 0.0
    %82 = vmatpush.xpose.msra.mxu0 0.0
    %83 = vmatpush.xpose.msra.mxu0 0.0
    %84 = vmatpush.xpose.msra.mxu0 0.0
    %85 = vmatpush.xpose.msra.mxu0 0.0
    %86 = vmatpush.xpose.msra.mxu0 0.0
    %87 = vmatpush.xpose.msra.mxu0 0.0
    %88 = vmatpush.xpose.msra.mxu0 0.0
    %89 = vmatpush.xpose.msra.mxu0 0.0
    %90 = vmatpush.xpose.msra.mxu0 0.0
    %91 = vmatpush.xpose.msra.mxu0 0.0
    %92 = vmatpush.xpose.msra.mxu0 %v75
    %93 = vmatmul.f32.gmra.mxu0 %v63
    %v94 = vpop.f32.mrf.mxu0
    %v95 = vadd.f32 0.0, %v94
    %96 = vmatmul.f32.gmra.mxu0 %v66
    %v97 = vpop.f32.mrf.mxu0
    %v98 = vadd.f32 0.0, %v97
    %99 = vmatmul.f32.gmra.mxu0 %v69
    %v100 = vpop.f32.mrf.mxu0
    %v101 = vadd.f32 0.0, %v100
    %102 = vmatmul.f32.gmra.mxu0 %v72
    %v103 = vpop.f32.mrf.mxu0
    %v104 = vadd.f32 0.0, %v103
    %105 = vdwg.mxu0
    %vm106 = vcmask 64512
    %v108 = vsel %vm106, %v51, 0
    %v111 = vsel %vm106, %v52, 0
    %v114 = vsel %vm106, %v53, 0
    %v117 = vsel %vm106, %v54, 0
    %v120 = vsel %vm106, %v55, 0
    %122 = vmatpush.xpose.msra.mxu0 0.0
    %123 = vmatpush.xpose.msra.mxu0 0.0
    %124 = vmatpush.xpose.msra.mxu0 0.0
    %125 = vmatpush.xpose.msra.mxu0 0.0
    %126 = vmatpush.xpose.msra.mxu0 0.0
    %127 = vmatpush.xpose.msra.mxu0 0.0
    %128 = vmatpush.xpose.msra.mxu0 0.0
    %129 = vmatpush.xpose.msra.mxu0 0.0
    %130 = vmatpush.xpose.msra.mxu0 0.0
    %131 = vmatpush.xpose.msra.mxu0 0.0
    %132 = vmatpush.xpose.msra.mxu0 0.0
    %133 = vmatpush.xpose.msra.mxu0 0.0
    %134 = vmatpush.xpose.msra.mxu0 0.0
    %135 = vmatpush.xpose.msra.mxu0 0.0
    %136 = vmatpush.xpose.msra.mxu0 0.0
    %137 = vmatpush.xpose.msra.mxu0 %v120
    %138 = vmatmul.f32.gmra.mxu0 %v108
    %v139 = vpop.f32.mrf.mxu0
    %v140 = vadd.f32 %v95, %v139
    %141 = vmatmul.f32.gmra.mxu0 %v111
    %v142 = vpop.f32.mrf.mxu0
    %v143 = vadd.f32 %v98, %v142
    %144 = vmatmul.f32.gmra.mxu0 %v114
    %v145 = vpop.f32.mrf.mxu0
    %v146 = vadd.f32 %v101, %v145
    %147 = vmatmul.f32.gmra.mxu0 %v117
    %v148 = vpop.f32.mrf.mxu0
    %v149 = vadd.f32 %v104, %v148
    %150 = vdwg.mxu0
    %v151 = vld [vmem:[%s4] sm:$0xff]
    %v152 = vld [vmem:[%s4 + $0x8] sm:$0xff]
    %v153 = vld [vmem:[%s4 + $0x10] sm:$0xff]
    %v154 = vld [vmem:[%s4 + $0x18] sm:$0xff]
    %156 = vset.pattern.permute.xlu0 0
    %157 = vperm.xlu0 %156, %v151
    %v158 = vpop.permute.xlu0 %157
    %161 = vset.pattern.permute.xlu0 0
    %162 = vperm.xlu0 %161, %v152
    %v163 = vpop.permute.xlu0 %162
    %166 = vset.pattern.permute.xlu0 0
    %167 = vperm.xlu0 %166, %v153
    %v168 = vpop.permute.xlu0 %167
    %171 = vset.pattern.permute.xlu0 0
    %172 = vperm.xlu0 %171, %v154
    %v173 = vpop.permute.xlu0 %172
    %v175 = vadd.f32 %v140, %v158
    %v176 = vadd.f32 %v143, %v163
    %v177 = vadd.f32 %v146, %v168
    %v178 = vadd.f32 %v149, %v173
    %vm179 = vcmp.ge.f32.partialorder %v175, 0.0
    %vm180 = vcmp.ge.f32.partialorder %v176, 0.0
    %vm181 = vcmp.ge.f32.partialorder %v177, 0.0
    %vm182 = vcmp.ge.f32.partialorder %v178, 0.0
    %v183 = vmul.f32 %v175, 0.001
    %v184 = vmul.f32 %v176, 0.001
    %v185 = vmul.f32 %v177, 0.001
    %v186 = vmul.f32 %v178, 0.001
    %v187 = vsel %vm179, %v175, %v183
    %v188 = vsel %vm180, %v176, %v184
    %v189 = vsel %vm181, %v177, %v185
    %v190 = vsel %vm182, %v178, %v186
    %v191 = vld [vmem:[%s5] sm:$0xff]
    %v192 = vld [vmem:[%s5 + $0x8] sm:$0xff]
    %v193 = vld [vmem:[%s5 + $0x10] sm:$0xff]
    %v194 = vld [vmem:[%s5 + $0x18] sm:$0xff]
    %v195 = vld [vmem:[%s6] sm:$0xff]
    %v196 = vld [vmem:[%s6 + $0x8] sm:$0xff]
    %v197 = vld [vmem:[%s6 + $0x10] sm:$0xff]
    %v198 = vld [vmem:[%s6 + $0x18] sm:$0xff]
    %200 = vset.pattern.permute.xlu0 0
    %201 = vperm.xlu0 %200, %v195
    %v202 = vpop.permute.xlu0 %201
    %205 = vset.pattern.permute.xlu0 0
    %206 = vperm.xlu0 %205, %v196
    %v207 = vpop.permute.xlu0 %206
    %210 = vset.pattern.permute.xlu0 0
    %211 = vperm.xlu0 %210, %v197
    %v212 = vpop.permute.xlu0 %211
    %215 = vset.pattern.permute.xlu0 0
    %216 = vperm.xlu0 %215, %v198
    %v217 = vpop.permute.xlu0 %216
    %vm219 = vcmask 261120
    %v221 = vsel %vm219, %v191, 0
    %v224 = vsel %vm219, %v192, 0
    %v227 = vsel %vm219, %v193, 0
    %v230 = vsel %vm219, %v194, 0
    %232 = vmatpush.msra.mxu0 0.0
    %233 = vmatpush.msra.mxu0 0.0
    %234 = vmatpush.msra.mxu0 0.0
    %235 = vmatpush.msra.mxu0 0.0
    %236 = vmatpush.msra.mxu0 0.0
    %237 = vmatpush.msra.mxu0 0.0
    %238 = vmatpush.msra.mxu0 0.0
    %239 = vmatpush.msra.mxu0 0.0
    %240 = vmatpush.msra.mxu0 0.0
    %241 = vmatpush.msra.mxu0 0.0
    %242 = vmatpush.msra.mxu0 0.0
    %243 = vmatpush.msra.mxu0 0.0
    %244 = vmatpush.msra.mxu0 %v190
    %245 = vmatpush.msra.mxu0 %v189
    %246 = vmatpush.msra.mxu0 %v188
    %247 = vmatpush.msra.mxu0 %v187
    %248 = vmatmul.f32.gmra.mxu0 %v221
    %v249 = vpop.f32.mrf.mxu0
    %v250 = vadd.f32 %v202, %v249
    %251 = vmatmul.f32.gmra.mxu0 %v224
    %v252 = vpop.f32.mrf.mxu0
    %v253 = vadd.f32 %v207, %v252
    %254 = vmatmul.f32.gmra.mxu0 %v227
    %v255 = vpop.f32.mrf.mxu0
    %v256 = vadd.f32 %v212, %v255
    %257 = vmatmul.f32.gmra.mxu0 %v230
    %v258 = vpop.f32.mrf.mxu0
    %v259 = vadd.f32 %v217, %v258
    %260 = vdwg.mxu0
    %vm261 = vcmp.ge.f32.partialorder %v250, 0.0
    %vm262 = vcmp.ge.f32.partialorder %v253, 0.0
    %vm263 = vcmp.ge.f32.partialorder %v256, 0.0
    %vm264 = vcmp.ge.f32.partialorder %v259, 0.0
    %v265 = vmul.f32 %v250, 0.001
    %v266 = vmul.f32 %v253, 0.001
    %v267 = vmul.f32 %v256, 0.001
    %v268 = vmul.f32 %v259, 0.001
    %v269 = vsel %vm261, %v250, %v265
    %v270 = vsel %vm262, %v253, %v266
    %v271 = vsel %vm263, %v256, %v267
    %v272 = vsel %vm264, %v259, %v268
    %v273 = vld [vmem:[%s7] sm:$0xff]
    %v274 = vld [vmem:[%s7 + $0x8] sm:$0xff]
    %v275 = vld [vmem:[%s7 + $0x10] sm:$0xff]
    %v276 = vld [vmem:[%s7 + $0x18] sm:$0xff]
    %v277 = vld [vmem:[%s8] sm:$0xff]
    %v278 = vld [vmem:[%s8 + $0x8] sm:$0xff]
    %v279 = vld [vmem:[%s8 + $0x10] sm:$0xff]
    %v280 = vld [vmem:[%s8 + $0x18] sm:$0xff]
    %282 = vset.pattern.permute.xlu0 0
    %283 = vperm.xlu0 %282, %v277
    %v284 = vpop.permute.xlu0 %283
    %287 = vset.pattern.permute.xlu0 0
    %288 = vperm.xlu0 %287, %v278
    %v289 = vpop.permute.xlu0 %288
    %292 = vset.pattern.permute.xlu0 0
    %293 = vperm.xlu0 %292, %v279
    %v294 = vpop.permute.xlu0 %293
    %297 = vset.pattern.permute.xlu0 0
    %298 = vperm.xlu0 %297, %v280
    %v299 = vpop.permute.xlu0 %298
    %v302 = vsel %vm219, %v273, 0
    %v305 = vsel %vm219, %v274, 0
    %v308 = vsel %vm219, %v275, 0
    %v311 = vsel %vm219, %v276, 0
    %313 = vmatpush.msra.mxu0 0.0
    %314 = vmatpush.msra.mxu0 0.0
    %315 = vmatpush.msra.mxu0 0.0
    %316 = vmatpush.msra.mxu0 0.0
    %317 = vmatpush.msra.mxu0 0.0
    %318 = vmatpush.msra.mxu0 0.0
    %319 = vmatpush.msra.mxu0 0.0
    %320 = vmatpush.msra.mxu0 0.0
    %321 = vmatpush.msra.mxu0 0.0
    %322 = vmatpush.msra.mxu0 0.0
    %323 = vmatpush.msra.mxu0 0.0
    %324 = vmatpush.msra.mxu0 0.0
    %325 = vmatpush.msra.mxu0 %v272
    %326 = vmatpush.msra.mxu0 %v271
    %327 = vmatpush.msra.mxu0 %v270
    %328 = vmatpush.msra.mxu0 %v269
    %329 = vmatmul.f32.gmra.mxu0 %v302
    %v330 = vpop.f32.mrf.mxu0
    %v331 = vadd.f32 %v284, %v330
    %332 = vmatmul.f32.gmra.mxu0 %v305
    %v333 = vpop.f32.mrf.mxu0
    %v334 = vadd.f32 %v289, %v333
    %335 = vmatmul.f32.gmra.mxu0 %v308
    %v336 = vpop.f32.mrf.mxu0
    %v337 = vadd.f32 %v294, %v336
    %338 = vmatmul.f32.gmra.mxu0 %v311
    %v339 = vpop.f32.mrf.mxu0
    %v340 = vadd.f32 %v299, %v339
    %341 = vdwg.mxu0
    %vm342 = vcmp.ge.f32.partialorder %v331, 0.0
    %vm343 = vcmp.ge.f32.partialorder %v334, 0.0
    %vm344 = vcmp.ge.f32.partialorder %v337, 0.0
    %vm345 = vcmp.ge.f32.partialorder %v340, 0.0
    %v346 = vmul.f32 %v331, 0.001
    %v347 = vmul.f32 %v334, 0.001
    %v348 = vmul.f32 %v337, 0.001
    %v349 = vmul.f32 %v340, 0.001
    %v350 = vsel %vm342, %v331, %v346
    %v351 = vsel %vm343, %v334, %v347
    %v352 = vsel %vm344, %v337, %v348
    %v353 = vsel %vm345, %v340, %v349
    %v354 = vld [vmem:[%s9] sm:$0xff]
    %v355 = vld [vmem:[%s9 + $0x8] sm:$0xff]
    %v356 = vld [vmem:[%s9 + $0x10] sm:$0xff]
    %v357 = vld [vmem:[%s9 + $0x18] sm:$0xff]
    %v358 = vld [vmem:[%s10] sm:$0xff]
    %v359 = vld [vmem:[%s10 + $0x8] sm:$0xff]
    %v360 = vld [vmem:[%s10 + $0x10] sm:$0xff]
    %v361 = vld [vmem:[%s10 + $0x18] sm:$0xff]
    %363 = vset.pattern.permute.xlu0 0
    %364 = vperm.xlu0 %363, %v358
    %v365 = vpop.permute.xlu0 %364
    %368 = vset.pattern.permute.xlu0 0
    %369 = vperm.xlu0 %368, %v359
    %v370 = vpop.permute.xlu0 %369
    %373 = vset.pattern.permute.xlu0 0
    %374 = vperm.xlu0 %373, %v360
    %v375 = vpop.permute.xlu0 %374
    %378 = vset.pattern.permute.xlu0 0
    %379 = vperm.xlu0 %378, %v361
    %v380 = vpop.permute.xlu0 %379
    %v383 = vsel %vm219, %v354, 0
    %v386 = vsel %vm219, %v355, 0
    %v389 = vsel %vm219, %v356, 0
    %v392 = vsel %vm219, %v357, 0
    %394 = vmatpush.msra.mxu0 0.0
    %395 = vmatpush.msra.mxu0 0.0
    %396 = vmatpush.msra.mxu0 0.0
    %397 = vmatpush.msra.mxu0 0.0
    %398 = vmatpush.msra.mxu0 0.0
    %399 = vmatpush.msra.mxu0 0.0
    %400 = vmatpush.msra.mxu0 0.0
    %401 = vmatpush.msra.mxu0 0.0
    %402 = vmatpush.msra.mxu0 0.0
    %403 = vmatpush.msra.mxu0 0.0
    %404 = vmatpush.msra.mxu0 0.0
    %405 = vmatpush.msra.mxu0 0.0
    %406 = vmatpush.msra.mxu0 %v353
    %407 = vmatpush.msra.mxu0 %v352
    %408 = vmatpush.msra.mxu0 %v351
    %409 = vmatpush.msra.mxu0 %v350
    %410 = vmatmul.f32.gmra.mxu0 %v383
    %v411 = vpop.f32.mrf.mxu0
    %v412 = vadd.f32 %v365, %v411
    %413 = vmatmul.f32.gmra.mxu0 %v386
    %v414 = vpop.f32.mrf.mxu0
    %v415 = vadd.f32 %v370, %v414
    %416 = vmatmul.f32.gmra.mxu0 %v389
    %v417 = vpop.f32.mrf.mxu0
    %v418 = vadd.f32 %v375, %v417
    %419 = vmatmul.f32.gmra.mxu0 %v392
    %v420 = vpop.f32.mrf.mxu0
    %v421 = vadd.f32 %v380, %v420
    %422 = vdwg.mxu0
    %vm423 = vcmp.ge.f32.partialorder %v412, 0.0
    %vm424 = vcmp.ge.f32.partialorder %v415, 0.0
    %vm425 = vcmp.ge.f32.partialorder %v418, 0.0
    %vm426 = vcmp.ge.f32.partialorder %v421, 0.0
    %v427 = vmul.f32 %v412, 0.001
    %v428 = vmul.f32 %v415, 0.001
    %v429 = vmul.f32 %v418, 0.001
    %v430 = vmul.f32 %v421, 0.001
    %v431 = vsel %vm423, %v412, %v427
    %v432 = vsel %vm424, %v415, %v428
    %v433 = vsel %vm425, %v418, %v429
    %v434 = vsel %vm426, %v421, %v430
    %v435 = vld [vmem:[%s11] sm:$0xff]
    %v436 = vld [vmem:[%s11 + $0x8] sm:$0xff]
    %v437 = vld [vmem:[%s11 + $0x10] sm:$0xff]
    %v438 = vld [vmem:[%s11 + $0x18] sm:$0xff]
    %v439 = vld [vmem:[%s12] sm:$0xff]
    %v440 = vld [vmem:[%s12 + $0x8] sm:$0xff]
    %v441 = vld [vmem:[%s12 + $0x10] sm:$0xff]
    %v442 = vld [vmem:[%s12 + $0x18] sm:$0xff]
    %444 = vset.pattern.permute.xlu0 0
    %445 = vperm.xlu0 %444, %v439
    %v446 = vpop.permute.xlu0 %445
    %449 = vset.pattern.permute.xlu0 0
    %450 = vperm.xlu0 %449, %v440
    %v451 = vpop.permute.xlu0 %450
    %454 = vset.pattern.permute.xlu0 0
    %455 = vperm.xlu0 %454, %v441
    %v456 = vpop.permute.xlu0 %455
    %459 = vset.pattern.permute.xlu0 0
    %460 = vperm.xlu0 %459, %v442
    %v461 = vpop.permute.xlu0 %460
    %v464 = vsel %vm219, %v435, 0
    %v467 = vsel %vm219, %v436, 0
    %v470 = vsel %vm219, %v437, 0
    %v473 = vsel %vm219, %v438, 0
    %475 = vmatpush.msra.mxu0 0.0
    %476 = vmatpush.msra.mxu0 0.0
    %477 = vmatpush.msra.mxu0 0.0
    %478 = vmatpush.msra.mxu0 0.0
    %479 = vmatpush.msra.mxu0 0.0
    %480 = vmatpush.msra.mxu0 0.0
    %481 = vmatpush.msra.mxu0 0.0
    %482 = vmatpush.msra.mxu0 0.0
    %483 = vmatpush.msra.mxu0 0.0
    %484 = vmatpush.msra.mxu0 0.0
    %485 = vmatpush.msra.mxu0 0.0
    %486 = vmatpush.msra.mxu0 0.0
    %487 = vmatpush.msra.mxu0 %v434
    %488 = vmatpush.msra.mxu0 %v433
    %489 = vmatpush.msra.mxu0 %v432
    %490 = vmatpush.msra.mxu0 %v431
    %491 = vmatmul.f32.gmra.mxu0 %v464
    %v492 = vpop.f32.mrf.mxu0
    %v493 = vadd.f32 %v446, %v492
    %494 = vmatmul.f32.gmra.mxu0 %v467
    %v495 = vpop.f32.mrf.mxu0
    %v496 = vadd.f32 %v451, %v495
    %497 = vmatmul.f32.gmra.mxu0 %v470
    %v498 = vpop.f32.mrf.mxu0
    %v499 = vadd.f32 %v456, %v498
    %500 = vmatmul.f32.gmra.mxu0 %v473
    %v501 = vpop.f32.mrf.mxu0
    %v502 = vadd.f32 %v461, %v501
    %503 = vdwg.mxu0
    %vm504 = vcmp.ge.f32.partialorder %v493, 0.0
    %vm505 = vcmp.ge.f32.partialorder %v496, 0.0
    %vm506 = vcmp.ge.f32.partialorder %v499, 0.0
    %vm507 = vcmp.ge.f32.partialorder %v502, 0.0
    %v508 = vmul.f32 %v493, 0.001
    %v509 = vmul.f32 %v496, 0.001
    %v510 = vmul.f32 %v499, 0.001
    %v511 = vmul.f32 %v502, 0.001
    %v512 = vsel %vm504, %v493, %v508
    %v513 = vsel %vm505, %v496, %v509
    %v514 = vsel %vm506, %v499, %v510
    %v515 = vsel %vm507, %v502, %v511
    %v516 = vld [vmem:[%s13] sm:$0xff]
    %v517 = vld [vmem:[%s14] sm:$0xff]
    %519 = vset.pattern.permute.xlu0 0
    %520 = vperm.xlu0 %519, %v517
    %v521 = vpop.permute.xlu0 %520
    %v524 = vsel %vm219, %v516, 0
    %526 = vmatpush.msra.mxu0 0.0
    %527 = vmatpush.msra.mxu0 0.0
    %528 = vmatpush.msra.mxu0 0.0
    %529 = vmatpush.msra.mxu0 0.0
    %530 = vmatpush.msra.mxu0 0.0
    %531 = vmatpush.msra.mxu0 0.0
    %532 = vmatpush.msra.mxu0 0.0
    %533 = vmatpush.msra.mxu0 0.0
    %534 = vmatpush.msra.mxu0 0.0
    %535 = vmatpush.msra.mxu0 0.0
    %536 = vmatpush.msra.mxu0 0.0
    %537 = vmatpush.msra.mxu0 0.0
    %538 = vmatpush.msra.mxu0 %v515
    %539 = vmatpush.msra.mxu0 %v514
    %540 = vmatpush.msra.mxu0 %v513
    %541 = vmatpush.msra.mxu0 %v512
    %542 = vmatmul.f32.gmra.mxu0 %v524
    %v543 = vpop.f32.mrf.mxu0
    %v544 = vadd.f32 %v521, %v543
    %545 = vdwg.mxu0
    %546 = vxpose.xlu0.b32.start [1/16] %v544, 128
    %547 = vxpose.xlu0.b32.cont [2/16] 0.0, 128
    %548 = vxpose.xlu0.b32.cont [3/16] 0.0, 128
    %549 = vxpose.xlu0.b32.cont [4/16] 0.0, 128
    %550 = vxpose.xlu0.b32.cont [5/16] 0.0, 128
    %551 = vxpose.xlu0.b32.cont [6/16] 0.0, 128
    %552 = vxpose.xlu0.b32.cont [7/16] 0.0, 128
    %553 = vxpose.xlu0.b32.cont [8/16] 0.0, 128
    %554 = vxpose.xlu0.b32.cont [9/16] 0.0, 128
    %555 = vxpose.xlu0.b32.cont [10/16] 0.0, 128
    %556 = vxpose.xlu0.b32.cont [11/16] 0.0, 128
    %557 = vxpose.xlu0.b32.cont [12/16] 0.0, 128
    %558 = vxpose.xlu0.b32.cont [13/16] 0.0, 128
    %559 = vxpose.xlu0.b32.cont [14/16] 0.0, 128
    %560 = vxpose.xlu0.b32.cont [15/16] 0.0, 128
    %561 = vxpose.xlu0.b32.end [16/16] 0.0, 128
    %v562 = vpop.trf.xlu0
    %v563 = vpop.trf.xlu0
    %v564 = vpop.trf.xlu0
    %v565 = vpop.trf.xlu0
    %v566 = vpop.trf.xlu0
    %v567 = vpop.trf.xlu0
    %v568 = vpop.trf.xlu0
    %v569 = vpop.trf.xlu0
    %v570 = vpop.trf.xlu0
    %v571 = vpop.trf.xlu0
    %v572 = vpop.trf.xlu0
    %v573 = vpop.trf.xlu0
    %v574 = vpop.trf.xlu0
    %v575 = vpop.trf.xlu0
    %v576 = vpop.trf.xlu0
    %v577 = vpop.trf.xlu0
    %vm578 = vcmask 58368
    %579 = vst.msk [vmem:[#allocation2] sm:$0x3] %vm578, %v562
    // Predicated region
    $region62: #{tpu_custom_call.1} parent=1 // pred_check
      _
    $region63: #{tpu_custom_call.1} parent=1 // pred_check_branch
      %581 = sbr.rel (0) target = $region65
    $region64: #{tpu_custom_call.1} parent=1 // pred_region
      %583 = vsyncadd [#allocation3], 0
      %s585 = sshll.u32 [#allocation2], 4
      %s586 = int_to_ptr.vmem [resolvable:$true] %s585
      %s587 = sshll.u32 %s15, 4
      %s588 = int_to_ptr.hbm [resolvable:$true] %s587
      %590 = dma.vmem_to_hbm [thread:$0]  %s586, 32, %s588, [#allocation3]
    $region65: #{tpu_custom_call.1} parent=1 // pred_fallthru
      _
    // Predicated region
    $region66: #{tpu_custom_call.1} parent=1 // pred_check
      _
    $region67: #{tpu_custom_call.1} parent=1 // pred_check_branch
      %592 = sbr.rel (0) target = $region69
    $region68: #{tpu_custom_call.1} parent=1 // pred_region
      %594 = dma.done [#allocation3], 32
    $region69: #{tpu_custom_call.1} parent=1 // pred_fallthru
      _
    %595 = vsyncpa [#allocation3], 1

</llo_original>
